<compile_context>
chip_gen: v5e
topology: v5e:2x2
jax: 0.10.0
libtpu: 0.0.40
codegen_flags: <defaults>
</compile_context>

<pallas_src>
import numpy as np

import jax
import jax.numpy as jnp
from jax import lax
from jax.experimental import pallas as pl
from jax.experimental.pallas import tpu as pltpu

_LANE = 128
_SUBLANE = 8

# Large lane-dense tiles: per-step DMA >> ~0.35 us fixed grid-step overhead.
#   reduce path : (4096, 128) f32 block = 2 MiB; 2 inputs x 2 buffers = 8 MiB
#   elementwise : (2048, 128) f32 block = 1 MiB; 3 streams x 2 buffers = 6 MiB
_MAX_TILE_ROWS_REDUCE = 4096
_MAX_TILE_ROWS_EW = 2048
# Explicit scoped-VMEM limit: lets v5e (16 MiB default) run the same tiles as
# v6e/v7x; 32 MiB is within every generation's physical VMEM.
_VMEM_LIMIT_BYTES = 32 * 1024 * 1024


def _cdiv(a, b):
    return -(-a // b)


def _sublane_pack(dtype):
    """Native second-minor tile: 8 rows for 4B dtypes, 16 for 2B, 32 for 1B."""
    bits = np.dtype(dtype).itemsize * 8
    if bits >= 32:
        return _SUBLANE
    return (32 // bits) * _SUBLANE


_NUM_CORES_CACHE = None


def _num_tensorcores():
    """Best-effort TensorCore count (2 on v7x-class chips, else 1)."""
    global _NUM_CORES_CACHE
    if _NUM_CORES_CACHE is None:
        cores = 1
        try:
            info = pltpu.get_tpu_info()
            for name in ("num_cores", "core_count", "num_tensorcores",
                         "tensorcores_per_chip", "cores_per_chip"):
                v = getattr(info, name, None)
                if (isinstance(v, (int, np.integer))
                        and not isinstance(v, bool) and 1 <= int(v) <= 8):
                    cores = int(v)
                    break
        except Exception:
            cores = 1
        _NUM_CORES_CACHE = cores
    return _NUM_CORES_CACHE


def _lane_dense(x, y, n, pack):
    """(rows, 128) lane-dense views of x and y.

    Free reshape when n is a multiple of the native (pack, 128) tile;
    otherwise pad only up to the next native tile boundary (<= pack*128-1
    zeros), never up to a whole grid tile.
    """
    align = pack * _LANE
    if n % align == 0:
        rows = n // _LANE
        return x.reshape(rows, _LANE), y.reshape(rows, _LANE), rows, False
    rows = _cdiv(n, align) * pack
    padn = rows * _LANE - n
    x2 = jnp.pad(x.reshape(-1), (0, padn)).reshape(rows, _LANE)
    y2 = jnp.pad(y.reshape(-1), (0, padn)).reshape(rows, _LANE)
    return x2, y2, rows, True


# ----------------------------- kernels --------------------------------------


def _make_sq_sum_kernel(rows, tile_rows, tiles, tiles_per_partial):
    """sum((x - y)^2) into an output-resident (8, 128) accumulator.

    Only the last real block (if it is a partial block) pays for a row mask;
    full blocks take the unmasked path (selected by pl.when).
    """
    needs_mask = (rows % tile_rows) != 0
    last = tiles - 1
    valid_last = rows - last * tile_rows
    groups = tile_rows // _SUBLANE

    def _fold(z):
        # (tile_rows, 128) -> (8, 128): sublane-group adds, VPU only (no XLU).
        return jnp.sum(z.reshape(groups, _SUBLANE, _LANE), axis=0)

    def kernel(x_ref, y_ref, out_ref):
        t = pl.program_id(1)

        @pl.when(t == 0)
        def _init():
            out_ref[...] = jnp.zeros_like(out_ref)

        # Native-dtype operands; f32 cast is a free VPU op on this HBM-bound
        # kernel and gives f32 accumulation.
        d = x_ref[...].astype(jnp.float32) - y_ref[...].astype(jnp.float32)
        dd = d * d

        if needs_mask:
            blk = pl.program_id(0) * tiles_per_partial + t
            is_last = blk == last

            @pl.when(is_last)
            def _tail():
                row_ids = lax.broadcasted_iota(jnp.int32, (tile_rows, _LANE), 0)
                out_ref[...] += _fold(jnp.where(row_ids < valid_last, dd, 0.0))

            @pl.when(jnp.logical_not(is_last))
            def _full():
                out_ref[...] += _fold(dd)
        else:
            out_ref[...] += _fold(dd)

    return kernel


def _diff_kernel(x_ref, y_ref, o_ref):
    o_ref[...] = (x_ref[...] - y_ref[...]).astype(o_ref.dtype)


def _sq_diff_kernel(x_ref, y_ref, o_ref):
    d = x_ref[...] - y_ref[...]
    o_ref[...] = (d * d).astype(o_ref.dtype)


# ----------------------------- wrappers --------------------------------------


def _reduced_sq_sum(x, y, n, pack):
    """sum((x - y)^2) over all n real elements, accumulated in f32."""
    x2, y2, rows, _ = _lane_dense(x, y, n, pack)
    tile_rows = min(_MAX_TILE_ROWS_REDUCE, rows)
    tiles = _cdiv(rows, tile_rows)

    # Split across TensorCores only on multi-core chips and only when it costs
    # no extra padded work (even tile count); otherwise single accumulator.
    num_partials = 2 if (_num_tensorcores() >= 2 and tiles % 2 == 0) else 1
    tiles_per_p = tiles // num_partials

    itemsize = np.dtype(x2.dtype).itemsize
    cost = pl.CostEstimate(
        flops=3 * n,
        transcendentals=0,
        bytes_accessed=2 * rows * _LANE * itemsize
        + num_partials * _SUBLANE * _LANE * 4)

    partials = pl.pallas_call(
        _make_sq_sum_kernel(rows, tile_rows, tiles, tiles_per_p),
        out_shape=jax.ShapeDtypeStruct((num_partials * _SUBLANE, _LANE),
                                       jnp.float32),
        grid_spec=pltpu.PrefetchScalarGridSpec(
            num_scalar_prefetch=0,
            grid=(num_partials, tiles_per_p),
            in_specs=[
                pl.BlockSpec((tile_rows, _LANE),
                             lambda p, t: (p * tiles_per_p + t, 0)),
                pl.BlockSpec((tile_rows, _LANE),
                             lambda p, t: (p * tiles_per_p + t, 0)),
            ],
            out_specs=pl.BlockSpec((_SUBLANE, _LANE), lambda p, t: (p, 0)),
        ),
        compiler_params=pltpu.CompilerParams(
            dimension_semantics=("parallel", "arbitrary"),
            vmem_limit_bytes=_VMEM_LIMIT_BYTES),
        cost_estimate=cost,
    )(x2, y2)
    # Tiny (<= 2*8*128 element) cross-partial / cross-lane reduce stays in XLA.
    return jnp.sum(partials)


def _elementwise(kernel, x, y, n, pack, orig_shape, out_dtype):
    x2, y2, rows, padded = _lane_dense(x, y, n, pack)
    tile_rows = min(_MAX_TILE_ROWS_EW, rows)
    tiles = _cdiv(rows, tile_rows)

    in_itemsize = np.dtype(x2.dtype).itemsize
    out_itemsize = np.dtype(out_dtype).itemsize
    cost = pl.CostEstimate(
        flops=2 * n,
        transcendentals=0,
        bytes_accessed=rows * _LANE * (2 * in_itemsize + out_itemsize))

    out = pl.pallas_call(
        kernel,
        out_shape=jax.ShapeDtypeStruct((rows, _LANE), out_dtype),
        grid_spec=pltpu.PrefetchScalarGridSpec(
            num_scalar_prefetch=0,
            grid=(tiles,),
            in_specs=[
                pl.BlockSpec((tile_rows, _LANE), lambda t: (t, 0)),
                pl.BlockSpec((tile_rows, _LANE), lambda t: (t, 0)),
            ],
            out_specs=pl.BlockSpec((tile_rows, _LANE), lambda t: (t, 0)),
        ),
        compiler_params=pltpu.CompilerParams(
            dimension_semantics=("parallel",),
            vmem_limit_bytes=_VMEM_LIMIT_BYTES),
        cost_estimate=cost,
    )(x2, y2)
    if padded:
        return out.reshape(-1)[:n].reshape(orig_shape)
    return out.reshape(orig_shape)


def photometric_loss(inp, target, mode="mean"):
    if mode is None:
        mode = "None"
    x = jnp.asarray(inp)
    y = jnp.asarray(target)
    assert x.shape == y.shape, "input/target shape mismatch"
    res_dtype = jnp.result_type(x.dtype, y.dtype)
    if x.dtype != res_dtype:
        x = x.astype(res_dtype)
    if y.dtype != res_dtype:
        y = y.astype(res_dtype)

    orig_shape = x.shape
    n = int(np.prod(orig_shape)) if orig_shape else 1
    pack = _sublane_pack(res_dtype)

    if mode in ("mean", "sum"):
        total = _reduced_sq_sum(x, y, n, pack)          # f32 scalar
        out = total if mode == "sum" else total / n
        return out.astype(res_dtype)
    elif mode == "None":
        return _elementwise(_diff_kernel, x, y, n, pack, orig_shape, res_dtype)
    else:
        # PyTorch fallback: unreduced squared difference.
        return _elementwise(_sq_diff_kernel, x, y, n, pack, orig_shape,
                            res_dtype)


# ----------------------------- reference / test -----------------------------


def _reference(x, y, mode):
    x32 = x.astype(jnp.float32)
    y32 = y.astype(jnp.float32)
    if mode == "mean":
        return jnp.mean((x32 - y32) ** 2)
    if mode == "sum":
        return jnp.sum((x32 - y32) ** 2)
    if mode == "None":
        return x - y
    return (x - y) ** 2


def _np_f32(a):
    return np.asarray(jnp.asarray(a, dtype=jnp.float32))


if __name__ == "__main__":
    key = jax.random.PRNGKey(0)
    k1, k2 = jax.random.split(key)

    def check(shape, dtype, mode, rtol, atol):
        x = jax.random.normal(k1, shape, dtype=jnp.float32).astype(dtype)
        y = jax.random.normal(k2, shape, dtype=jnp.float32).astype(dtype)
        out = jax.block_until_ready(photometric_loss(x, y, mode=mode))
        ref = _reference(x, y, mode)
        np.testing.assert_allclose(_np_f32(out), _np_f32(ref),
                                   rtol=rtol, atol=atol)

    # Small image-like shape from the module: (B, C, H, W); tile-aligned.
    for mode in ("mean", "sum", "None", "unreduced"):
        check((2, 4, 16, 16), jnp.float32, mode, 1e-5, 1e-5)

    # Flattened size needing minimal tail padding (unaligned path).
    for mode in ("mean", "sum", "None"):
        check((2, 3, 13, 7), jnp.float32, mode, 1e-5, 1e-5)

    # bf16 operands stream in bf16; the f32 cast happens inside the kernel.
    for mode in ("mean", "None"):
        check((2, 4, 16, 16), jnp.bfloat16, mode, 2e-2, 2e-2)

    # Larger input: multiple tiles, masked partial last block, and the
    # 2-TensorCore reduction split when the chip has two cores.
    for mode in ("mean", "sum", "None"):
        check((4, 8, 128, 144), jnp.float32, mode, 1e-4, 1e-4)

    print("KERNEL_OK")
</pallas_src>

<mosaic_0001>
module attributes {stable_mosaic.version = 11 : i64} {
  func.func @kernel(%arg0: i32, %arg1: i32, %arg2: memref<16x128xf32, #tpu.memory_space<vmem>>, %arg3: memref<16x128xf32, #tpu.memory_space<vmem>>, %arg4: memref<8x128xf32, #tpu.memory_space<vmem>>) attributes {dimension_semantics = [#tpu.dimension_semantics<parallel>, #tpu.dimension_semantics<arbitrary>], iteration_bounds = array<i64: 1, 1>, scalar_prefetch = 0 : i64, scratch_operands = 0 : i64, tpu.core_type = #tpu.core_type<tc>, window_params = [{transform_indices = @transform_0, window_bounds = array<i64: 16, 128>}, {transform_indices = @transform_1, window_bounds = array<i64: 16, 128>}, {transform_indices = @transform_2, window_bounds = array<i64: 8, 128>}]} {
    %c0_i32 = arith.constant 0 : i32
    %0 = arith.cmpi eq, %arg1, %c0_i32 : i32
    %1 = arith.extui %0 : i1 to i32
    %c0_i32_0 = arith.constant 0 : i32
    %2 = arith.cmpi ne, %1, %c0_i32_0 : i32
    scf.if %2 {
      %cst_8 = arith.constant 0.000000e+00 : f32
      %12 = vector.broadcast %cst_8 : f32 to vector<8x128xf32>
      %c0_9 = arith.constant 0 : index
      %c0_10 = arith.constant 0 : index
      %13 = vector.load %arg4[%c0_9, %c0_10] : memref<8x128xf32, #tpu.memory_space<vmem>>, vector<8x128xf32>
      tpu.vector_store %arg4[%c0_9, %c0_10], %12 {strides = array<i32>} : memref<8x128xf32, #tpu.memory_space<vmem>>, vector<8x128xf32>,
    } else {
    }
    %c0 = arith.constant 0 : index
    %c0_1 = arith.constant 0 : index
    %3 = vector.load %arg2[%c0, %c0_1] : memref<16x128xf32, #tpu.memory_space<vmem>>, vector<16x128xf32>
    %c0_2 = arith.constant 0 : index
    %c0_3 = arith.constant 0 : index
    %4 = vector.load %arg3[%c0_2, %c0_3] : memref<16x128xf32, #tpu.memory_space<vmem>>, vector<16x128xf32>
    %5 = arith.subf %3, %4 : vector<16x128xf32>
    %6 = arith.mulf %5, %5 : vector<16x128xf32>
    %c0_4 = arith.constant 0 : index
    %c0_5 = arith.constant 0 : index
    %7 = vector.load %arg4[%c0_4, %c0_5] : memref<8x128xf32, #tpu.memory_space<vmem>>, vector<8x128xf32>
    %8 = vector.shape_cast %6 : vector<16x128xf32> to vector<2x8x128xf32>
    %cst = arith.constant dense<0.000000e+00> : vector<8x128xf32>
    %9 = vector.multi_reduction <add>, %8, %cst [0] : vector<2x8x128xf32> to vector<8x128xf32>
    %10 = arith.addf %7, %9 : vector<8x128xf32>
    %c0_6 = arith.constant 0 : index
    %c0_7 = arith.constant 0 : index
    %11 = vector.load %arg4[%c0_6, %c0_7] : memref<8x128xf32, #tpu.memory_space<vmem>>, vector<8x128xf32>
    tpu.vector_store %arg4[%c0_6, %c0_7], %10 {strides = array<i32>} : memref<8x128xf32, #tpu.memory_space<vmem>>, vector<8x128xf32>,
    return
  }
  func.func @transform_0(%arg0: i32, %arg1: i32) -> (i32, i32) {
    %c1_i32 = arith.constant 1 : i32
    %0 = arith.muli %arg0, %c1_i32 : i32
    %1 = arith.addi %0, %arg1 : i32
    %c0_i32 = arith.constant 0 : i32
    %c0_i32_0 = arith.constant 0 : i32
    return %1, %c0_i32 : i32, i32
  }
  func.func @transform_1(%arg0: i32, %arg1: i32) -> (i32, i32) {
    %c1_i32 = arith.constant 1 : i32
    %0 = arith.muli %arg0, %c1_i32 : i32
    %1 = arith.addi %0, %arg1 : i32
    %c0_i32 = arith.constant 0 : i32
    %c0_i32_0 = arith.constant 0 : i32
    return %1, %c0_i32 : i32, i32
  }
  func.func @transform_2(%arg0: i32, %arg1: i32) -> (i32, i32) {
    %c0_i32 = arith.constant 0 : i32
    %c0_i32_0 = arith.constant 0 : i32
    return %arg0, %c0_i32 : i32, i32
  }
}

</mosaic_0001>

<llo_original>
// kernel: tpu_custom_call.1
$region0: #{tpu_custom_call.1}
  #allocation0 [shape = 'u32[]', space=smem, size = 0x4, offset = 0x4, fixed_abs, tag = 'smem constant byte address 0x4 - core index']
  #allocation1 [shape = 'u32[72,128]{1,0:T(1,128)}', space=vmem, size = 0x9000, scoped, tag = 'internal scratch']
  %s0 = inlined_call_operand.hbm [shape: f32[16,128], index: 0, kind: input, shape index: {}]
  %s1 = inlined_call_operand.hbm [shape: f32[16,128], index: 1, kind: input, shape index: {}]
  %s2 = inlined_call_operand.hbm [shape: f32[8,128], index: 2, kind: output, shape index: {}]
  %s3 = sld [smem:[#allocation0]]
  $region30: #{tpu_custom_call.1} parent=0
    _
  %s5 = ssub.s32 1, %s3
  %s6 = scalar_select 0, %s5, %s3
  $region1: #{tpu_custom_call.1} parent=0
    #allocation2 [shape = 'u8[8192]{0}', space=vmem, size = 0x2000, scoped, tag = 'input window, operand 0, single buffered']
    #allocation3 [shape = 's32[1]{0}', space=sflag, size = 0x4, scoped, tag = 'scoped memory for tpu_custom_call.1']
    #allocation4 [shape = 's32[1]{0}', space=sflag, size = 0x4, scoped, tag = 'scoped memory for tpu_custom_call.1']
    #allocation5 [shape = 'u8[8192]{0}', space=vmem, size = 0x2000, scoped, tag = 'input window, operand 1, single buffered']
    #allocation6 [shape = 's32[1]{0}', space=sflag, size = 0x4, scoped, tag = 'scoped memory for tpu_custom_call.1']
    #allocation7 [shape = 'u8[4096]{0}', space=vmem, size = 0x1000, scoped, tag = 'output window, operand 0, single buffered']
    %7 = vsyncpa [#allocation3], 0
    %8 = vsyncpa [#allocation6], 0
    %9 = vsyncpa [#allocation4], 0
    // Predicated region
    $region2: #{tpu_custom_call.1} parent=1 // pred_check
      _
    $region3: #{tpu_custom_call.1} parent=1 // pred_check_branch
      %11 = sbr.rel (0) target = $region5
    $region4: #{tpu_custom_call.1} parent=1 // pred_region
      %s12 = sadd.s32 0, 0
      %s13 = smul.u32 2, %s12
      %15 = vsyncadd [#allocation3], 0
      %s16 = smul.addr %s13, 8
      %s17 = scalar_lea.hbm %s0, %s16
      %s18 = sshll.u32 %s17, 4
      %s19 = int_to_ptr.hbm [resolvable:$true] %s18
      %s20 = sshll.u32 [#allocation2], 4
      %s21 = int_to_ptr.vmem [resolvable:$true] %s20
      %26 = dma.hbm_to_vmem [thread:$0]  %s19, 256, %s21, [#allocation3], 128, 128, 8
    $region5: #{tpu_custom_call.1} parent=1 // pred_fallthru
      _
    // Predicated region
    $region6: #{tpu_custom_call.1} parent=1 // pred_check
      _
    $region7: #{tpu_custom_call.1} parent=1 // pred_check_branch
      %28 = sbr.rel (0) target = $region9
    $region8: #{tpu_custom_call.1} parent=1 // pred_region
      %s29 = sadd.s32 0, 0
      %s30 = smul.u32 2, %s29
      %32 = vsyncadd [#allocation6], 0
      %s33 = smul.addr %s30, 8
      %s34 = scalar_lea.hbm %s1, %s33
      %s35 = sshll.u32 %s34, 4
      %s36 = int_to_ptr.hbm [resolvable:$true] %s35
      %s37 = sshll.u32 [#allocation5], 4
      %s38 = int_to_ptr.vmem [resolvable:$true] %s37
      %43 = dma.hbm_to_vmem [thread:$0]  %s36, 256, %s38, [#allocation6], 128, 128, 8
    $region9: #{tpu_custom_call.1} parent=1 // pred_fallthru
      _
    // Predicated region
    $region10: #{tpu_custom_call.1} parent=1 // pred_check
      _
    $region11: #{tpu_custom_call.1} parent=1 // pred_check_branch
      %45 = sbr.rel (0) target = $region13
    $region12: #{tpu_custom_call.1} parent=1 // pred_region
      %47 = dma.done [#allocation3], 256
    $region13: #{tpu_custom_call.1} parent=1 // pred_fallthru
      _
    // Predicated region
    $region14: #{tpu_custom_call.1} parent=1 // pred_check
      _
    $region15: #{tpu_custom_call.1} parent=1 // pred_check_branch
      %49 = sbr.rel (0) target = $region17
    $region16: #{tpu_custom_call.1} parent=1 // pred_region
      %51 = dma.done [#allocation6], 256
    $region17: #{tpu_custom_call.1} parent=1 // pred_fallthru
      _
    %s52 = sadd.s32 0, 0
    %s53 = smul.u32 2, %s52
    %s54 = sadd.s32 0, 0
    %s55 = smul.u32 2, %s54
    %p56 = scmp.eq.s32.totalorder 0, 0
    // Predicated region
    $region18: #{tpu_custom_call.1} parent=1 // pred_check
      %p57 = pneg %p56
    $region19: #{tpu_custom_call.1} parent=1 // pred_check_branch
      %59 = sbr.rel (%p57) target = $region21
    $region20: #{tpu_custom_call.1} parent=1 // pred_region
      %60 = vst [vmem:[#allocation7] sm:$0xff] 0.0
    $region21: #{tpu_custom_call.1} parent=1 // pred_fallthru
      _
    %v61 = vld [vmem:[#allocation2] sm:$0xff]
    %v62 = vld [vmem:[#allocation2 + $0x8] sm:$0xff]
    %v63 = vld [vmem:[#allocation5] sm:$0xff]
    %v64 = vld [vmem:[#allocation5 + $0x8] sm:$0xff]
    %v65 = vsub.f32 %v61, %v63
    %v66 = vsub.f32 %v62, %v64
    %v67 = vmul.f32 %v65, %v65
    %v68 = vmul.f32 %v66, %v66
    %v69 = vld [vmem:[#allocation7] sm:$0xff]
    %v70 = vadd.f32 %v67, %v68
    %v71 = vadd.f32 %v69, %v70
    %72 = vst [vmem:[#allocation7] sm:$0xff] %v71
    // Predicated region
    $region22: #{tpu_custom_call.1} parent=1 // pred_check
      _
    $region23: #{tpu_custom_call.1} parent=1 // pred_check_branch
      %74 = sbr.rel (0) target = $region25
    $region24: #{tpu_custom_call.1} parent=1 // pred_region
      %76 = vsyncadd [#allocation4], 0
      %s78 = sshll.u32 [#allocation7], 4
      %s79 = int_to_ptr.vmem [resolvable:$true] %s78
      %s80 = sshll.u32 %s2, 4
      %s81 = int_to_ptr.hbm [resolvable:$true] %s80
      %83 = dma.vmem_to_hbm [thread:$0]  %s79, 128, %s81, [#allocation4]
    $region25: #{tpu_custom_call.1} parent=1 // pred_fallthru
      _
    // Predicated region
    $region26: #{tpu_custom_call.1} parent=1 // pred_check
      _
    $region27: #{tpu_custom_call.1} parent=1 // pred_check_branch
      %85 = sbr.rel (0) target = $region29
    $region28: #{tpu_custom_call.1} parent=1 // pred_region
      %87 = dma.done [#allocation4], 128
    $region29: #{tpu_custom_call.1} parent=1 // pred_fallthru
      _
    %88 = vsyncpa [#allocation3], 1
    %89 = vsyncpa [#allocation6], 1
    %90 = vsyncpa [#allocation4], 1

</llo_original>
